<compile_context>
chip_gen: v5e
topology: v5e:2x2
jax: 0.10.0
libtpu: 0.0.40
codegen_flags: <defaults>
</compile_context>

<pallas_src>
import jax
import jax.numpy as jnp
from jax.experimental import pallas as pl
from jax.experimental.pallas import tpu as pltpu

GRID_SIZE = 5
IN_DIM = GRID_SIZE * GRID_SIZE   # 25
HID = 64
OUT_DIM = 3
OUT_PAD = 128                    # lane-dense padded output width


def pgn_kernel(x_ref, w1_ref, w2_ref, w3_ref, w4_ref, b_ref, o_ref):
    # x_ref: (TILE_B, IN_DIM) tile of the batch; weights/biases are fully
    # VMEM-resident across all grid steps (constant index_maps).
    x = x_ref[...]

    h = jnp.dot(x.astype(w1_ref.dtype), w1_ref[...],
                preferred_element_type=jnp.float32)
    h = jnp.maximum(h + b_ref[0:1, :HID], 0.0)

    h = jnp.dot(h.astype(w2_ref.dtype), w2_ref[...],
                preferred_element_type=jnp.float32)
    h = jnp.maximum(h + b_ref[1:2, :HID], 0.0)

    h = jnp.dot(h.astype(w3_ref.dtype), w3_ref[...],
                preferred_element_type=jnp.float32)
    h = jnp.maximum(h + b_ref[2:3, :HID], 0.0)

    out = jnp.dot(h.astype(w4_ref.dtype), w4_ref[...],
                  preferred_element_type=jnp.float32)
    # b_ref row 3 is b4 zero-padded to OUT_PAD lanes -> lane-dense store.
    o_ref[...] = (out + b_ref[3:4, :]).astype(o_ref.dtype)


def pgn_forward(x, params, *, tile_b=512, weight_dtype=jnp.float32):
    """x: (B, 25) float32.  params: dict of transposed (in, out) weights / biases."""
    B = x.shape[0]

    w1 = params["w1"].astype(weight_dtype)
    w2 = params["w2"].astype(weight_dtype)
    w3 = params["w3"].astype(weight_dtype)
    # Pad fc4's output dim 3 -> 128 so the last matmul / store are lane-dense.
    w4 = jnp.pad(params["w4"],
                 ((0, 0), (0, OUT_PAD - OUT_DIM))).astype(weight_dtype)

    # Pack all biases into a single (4, OUT_PAD) f32 array (one DMA, one tile):
    # rows 0..2 hold b1..b3 in the first HID lanes, row 3 holds b4 zero-padded.
    bias_pack = jnp.zeros((4, OUT_PAD), jnp.float32)
    bias_pack = bias_pack.at[0, :HID].set(params["b1"].reshape(-1))
    bias_pack = bias_pack.at[1, :HID].set(params["b2"].reshape(-1))
    bias_pack = bias_pack.at[2, :HID].set(params["b3"].reshape(-1))
    bias_pack = bias_pack.at[3, :OUT_DIM].set(params["b4"].reshape(-1))

    # Batch tiling: tile of tile_b rows (or the whole, 8-aligned, batch if small).
    tb = tile_b if B >= tile_b else max(8, ((B + 7) // 8) * 8)
    num_tiles = pl.cdiv(B, tb)
    b_padded = num_tiles * tb
    if b_padded != B:
        x = jnp.pad(x, ((0, b_padded - B), (0, 0)))

    resident = lambda a: pl.BlockSpec(a.shape, lambda i: (0, 0))

    out = pl.pallas_call(
        pgn_kernel,
        out_shape=jax.ShapeDtypeStruct((b_padded, OUT_PAD), jnp.float32),
        grid=(num_tiles,),
        in_specs=[
            pl.BlockSpec((tb, IN_DIM), lambda i: (i, 0)),   # x: tiled over batch
            resident(w1), resident(w2), resident(w3), resident(w4),
            resident(bias_pack),
        ],
        out_specs=pl.BlockSpec((tb, OUT_PAD), lambda i: (i, 0)),
        compiler_params=pltpu.CompilerParams(
            dimension_semantics=("parallel",),
        ),
    )(x, w1, w2, w3, w4, bias_pack)

    return out[:B, :OUT_DIM]


def init_params(key):
    """Deterministic init mimicking PyTorch's default Linear init
    (uniform in [-1/sqrt(fan_in), 1/sqrt(fan_in)]).  Weights are stored as
    (in_features, out_features) — i.e. transposed vs. torch's (out, in)."""
    def linear(key, fan_in, fan_out):
        kw, kb = jax.random.split(key)
        bound = 1.0 / jnp.sqrt(fan_in)
        w = jax.random.uniform(kw, (fan_in, fan_out), jnp.float32, -bound, bound)
        b = jax.random.uniform(kb, (1, fan_out), jnp.float32, -bound, bound)
        return w, b

    k1, k2, k3, k4 = jax.random.split(key, 4)
    w1, b1 = linear(k1, IN_DIM, HID)
    w2, b2 = linear(k2, HID, HID)
    w3, b3 = linear(k3, HID, HID)
    w4, b4 = linear(k4, HID, OUT_DIM)
    return dict(w1=w1, b1=b1, w2=w2, b2=b2, w3=w3, b3=b3, w4=w4, b4=b4)


def pgn_reference(x, p):
    h = jnp.maximum(x @ p["w1"] + p["b1"], 0.0)
    h = jnp.maximum(h @ p["w2"] + p["b2"], 0.0)
    h = jnp.maximum(h @ p["w3"] + p["b3"], 0.0)
    return h @ p["w4"] + p["b4"]


if __name__ == "__main__":
    key = jax.random.PRNGKey(0)
    kp, kx = jax.random.split(key)

    params = init_params(kp)
    batch = 8
    x = jax.random.normal(kx, (batch, IN_DIM), dtype=jnp.float32)

    out = pgn_forward(x, params)
    out = jax.block_until_ready(out)

    ref = pgn_reference(x, params)
    assert out.shape == (batch, OUT_DIM)
    assert jnp.allclose(out, ref, atol=1e-5, rtol=1e-5)

    # Also exercise the multi-tile, non-multiple-of-tile path (pipelined grid).
    kx2 = jax.random.fold_in(kx, 1)
    x_big = jax.random.normal(kx2, (1037, IN_DIM), dtype=jnp.float32)
    out_big = jax.block_until_ready(pgn_forward(x_big, params, tile_b=512))
    ref_big = pgn_reference(x_big, params)
    assert out_big.shape == (1037, OUT_DIM)
    assert jnp.allclose(out_big, ref_big, atol=1e-5, rtol=1e-5)

    print("KERNEL_OK")
</pallas_src>

<mosaic_0001>
module attributes {stable_mosaic.version = 11 : i64} {
  func.func @pgn_kernel(%arg0: i32, %arg1: memref<8x25xf32, #tpu.memory_space<vmem>>, %arg2: memref<25x64xf32, #tpu.memory_space<vmem>>, %arg3: memref<64x64xf32, #tpu.memory_space<vmem>>, %arg4: memref<64x64xf32, #tpu.memory_space<vmem>>, %arg5: memref<64x128xf32, #tpu.memory_space<vmem>>, %arg6: memref<4x128xf32, #tpu.memory_space<vmem>>, %arg7: memref<8x128xf32, #tpu.memory_space<vmem>>) attributes {dimension_semantics = [#tpu.dimension_semantics<parallel>], iteration_bounds = array<i64: 1>, scalar_prefetch = 0 : i64, scratch_operands = 0 : i64, tpu.core_type = #tpu.core_type<tc>, window_params = [{transform_indices = @transform_0, window_bounds = array<i64: 8, 25>}, {pipeline_mode = #tpu.pipeline_mode<synchronous>, transform_indices = @transform_1, window_bounds = array<i64: 25, 64>}, {pipeline_mode = #tpu.pipeline_mode<synchronous>, transform_indices = @transform_2, window_bounds = array<i64: 64, 64>}, {pipeline_mode = #tpu.pipeline_mode<synchronous>, transform_indices = @transform_3, window_bounds = array<i64: 64, 64>}, {pipeline_mode = #tpu.pipeline_mode<synchronous>, transform_indices = @transform_4, window_bounds = array<i64: 64, 128>}, {pipeline_mode = #tpu.pipeline_mode<synchronous>, transform_indices = @transform_5, window_bounds = array<i64: 4, 128>}, {transform_indices = @transform_6, window_bounds = array<i64: 8, 128>}]} {
    %c0 = arith.constant 0 : index
    %c0_0 = arith.constant 0 : index
    %0 = vector.load %arg1[%c0, %c0_0] : memref<8x25xf32, #tpu.memory_space<vmem>>, vector<8x25xf32>
    %c0_1 = arith.constant 0 : index
    %c0_2 = arith.constant 0 : index
    %1 = vector.load %arg2[%c0_1, %c0_2] : memref<25x64xf32, #tpu.memory_space<vmem>>, vector<25x64xf32>
    %cst = arith.constant dense<0.000000e+00> : vector<8x64xf32>
    %2 = tpu.matmul %0, %1, %cst {dimension_numbers = #tpu.dot_dimension_numbers<[1], [0], [0], [1], [0, 0, 1, 1], [], []>} : vector<8x25xf32>, vector<25x64xf32>, vector<8x64xf32> -> vector<8x64xf32>
    %c0_3 = arith.constant 0 : index
    %c0_4 = arith.constant 0 : index
    %3 = vector.load %arg6[%c0_3, %c0_4] : memref<4x128xf32, #tpu.memory_space<vmem>>, vector<1x64xf32>
    %4 = vector.broadcast %3 : vector<1x64xf32> to vector<8x64xf32>
    %5 = arith.addf %2, %4 : vector<8x64xf32>
    %cst_5 = arith.constant 0.000000e+00 : f32
    %6 = vector.broadcast %cst_5 : f32 to vector<8x64xf32>
    %7 = arith.maximumf %5, %6 : vector<8x64xf32>
    %c0_6 = arith.constant 0 : index
    %c0_7 = arith.constant 0 : index
    %8 = vector.load %arg3[%c0_6, %c0_7] : memref<64x64xf32, #tpu.memory_space<vmem>>, vector<64x64xf32>
    %cst_8 = arith.constant dense<0.000000e+00> : vector<8x64xf32>
    %9 = tpu.matmul %7, %8, %cst_8 {dimension_numbers = #tpu.dot_dimension_numbers<[1], [0], [0], [1], [0, 0, 1, 1], [], []>} : vector<8x64xf32>, vector<64x64xf32>, vector<8x64xf32> -> vector<8x64xf32>
    %c1 = arith.constant 1 : index
    %c0_9 = arith.constant 0 : index
    %10 = vector.load %arg6[%c1, %c0_9] : memref<4x128xf32, #tpu.memory_space<vmem>>, vector<1x64xf32>
    %11 = vector.broadcast %10 : vector<1x64xf32> to vector<8x64xf32>
    %12 = arith.addf %9, %11 : vector<8x64xf32>
    %cst_10 = arith.constant 0.000000e+00 : f32
    %13 = vector.broadcast %cst_10 : f32 to vector<8x64xf32>
    %14 = arith.maximumf %12, %13 : vector<8x64xf32>
    %c0_11 = arith.constant 0 : index
    %c0_12 = arith.constant 0 : index
    %15 = vector.load %arg4[%c0_11, %c0_12] : memref<64x64xf32, #tpu.memory_space<vmem>>, vector<64x64xf32>
    %cst_13 = arith.constant dense<0.000000e+00> : vector<8x64xf32>
    %16 = tpu.matmul %14, %15, %cst_13 {dimension_numbers = #tpu.dot_dimension_numbers<[1], [0], [0], [1], [0, 0, 1, 1], [], []>} : vector<8x64xf32>, vector<64x64xf32>, vector<8x64xf32> -> vector<8x64xf32>
    %c2 = arith.constant 2 : index
    %c0_14 = arith.constant 0 : index
    %17 = vector.load %arg6[%c2, %c0_14] : memref<4x128xf32, #tpu.memory_space<vmem>>, vector<1x64xf32>
    %18 = vector.broadcast %17 : vector<1x64xf32> to vector<8x64xf32>
    %19 = arith.addf %16, %18 : vector<8x64xf32>
    %cst_15 = arith.constant 0.000000e+00 : f32
    %20 = vector.broadcast %cst_15 : f32 to vector<8x64xf32>
    %21 = arith.maximumf %19, %20 : vector<8x64xf32>
    %c0_16 = arith.constant 0 : index
    %c0_17 = arith.constant 0 : index
    %22 = vector.load %arg5[%c0_16, %c0_17] : memref<64x128xf32, #tpu.memory_space<vmem>>, vector<64x128xf32>
    %cst_18 = arith.constant dense<0.000000e+00> : vector<8x128xf32>
    %23 = tpu.matmul %21, %22, %cst_18 {dimension_numbers = #tpu.dot_dimension_numbers<[1], [0], [0], [1], [0, 0, 1, 1], [], []>} : vector<8x64xf32>, vector<64x128xf32>, vector<8x128xf32> -> vector<8x128xf32>
    %c3 = arith.constant 3 : index
    %c0_19 = arith.constant 0 : index
    %24 = vector.load %arg6[%c3, %c0_19] : memref<4x128xf32, #tpu.memory_space<vmem>>, vector<1x128xf32>
    %25 = vector.broadcast %24 : vector<1x128xf32> to vector<8x128xf32>
    %26 = arith.addf %23, %25 : vector<8x128xf32>
    %c0_20 = arith.constant 0 : index
    %c0_21 = arith.constant 0 : index
    %27 = vector.load %arg7[%c0_20, %c0_21] : memref<8x128xf32, #tpu.memory_space<vmem>>, vector<8x128xf32>
    tpu.vector_store %arg7[%c0_20, %c0_21], %26 {strides = array<i32>} : memref<8x128xf32, #tpu.memory_space<vmem>>, vector<8x128xf32>,
    return
  }
  func.func @transform_0(%arg0: i32) -> (i32, i32) {
    %c0_i32 = arith.constant 0 : i32
    %c0_i32_0 = arith.constant 0 : i32
    return %arg0, %c0_i32 : i32, i32
  }
  func.func @transform_1(%arg0: i32) -> (i32, i32) {
    %c0_i32 = arith.constant 0 : i32
    %c0_i32_0 = arith.constant 0 : i32
    %c0_i32_1 = arith.constant 0 : i32
    return %c0_i32, %c0_i32_0 : i32, i32
  }
  func.func @transform_2(%arg0: i32) -> (i32, i32) {
    %c0_i32 = arith.constant 0 : i32
    %c0_i32_0 = arith.constant 0 : i32
    %c0_i32_1 = arith.constant 0 : i32
    return %c0_i32, %c0_i32_0 : i32, i32
  }
  func.func @transform_3(%arg0: i32) -> (i32, i32) {
    %c0_i32 = arith.constant 0 : i32
    %c0_i32_0 = arith.constant 0 : i32
    %c0_i32_1 = arith.constant 0 : i32
    return %c0_i32, %c0_i32_0 : i32, i32
  }
  func.func @transform_4(%arg0: i32) -> (i32, i32) {
    %c0_i32 = arith.constant 0 : i32
    %c0_i32_0 = arith.constant 0 : i32
    %c0_i32_1 = arith.constant 0 : i32
    return %c0_i32, %c0_i32_0 : i32, i32
  }
  func.func @transform_5(%arg0: i32) -> (i32, i32) {
    %c0_i32 = arith.constant 0 : i32
    %c0_i32_0 = arith.constant 0 : i32
    %c0_i32_1 = arith.constant 0 : i32
    return %c0_i32, %c0_i32_0 : i32, i32
  }
  func.func @transform_6(%arg0: i32) -> (i32, i32) {
    %c0_i32 = arith.constant 0 : i32
    %c0_i32_0 = arith.constant 0 : i32
    return %arg0, %c0_i32 : i32, i32
  }
}

</mosaic_0001>

<llo_original>
// kernel: tpu_custom_call.1
$region0: #{tpu_custom_call.1}
  #allocation0 [shape = 'u32[]', space=smem, size = 0x4, offset = 0x4, fixed_abs, tag = 'smem constant byte address 0x4 - core index']
  #allocation1 [shape = 'u32[72,128]{1,0:T(1,128)}', space=vmem, size = 0x9000, scoped, tag = 'internal scratch']
  %s0 = inlined_call_operand.hbm [shape: f32[8,25], index: 0, kind: input, shape index: {}]
  %s1 = inlined_call_operand.hbm [shape: f32[25,64], index: 1, kind: input, shape index: {}]
  %s2 = inlined_call_operand.hbm [shape: f32[64,64], index: 2, kind: input, shape index: {}]
  %s3 = inlined_call_operand.hbm [shape: f32[64,64], index: 3, kind: input, shape index: {}]
  %s4 = inlined_call_operand.hbm [shape: f32[64,128], index: 4, kind: input, shape index: {}]
  %s5 = inlined_call_operand.vmem [shape: f32[4,128], index: 5, kind: input, shape index: {}]
  %s6 = inlined_call_operand.hbm [shape: f32[8,128], index: 6, kind: output, shape index: {}]
  %s7 = sld [smem:[#allocation0]]
  $region54: #{tpu_custom_call.1} parent=0
    _
  %s9 = ssub.s32 1, %s7
  %s10 = scalar_select 0, %s9, %s7
  $region1: #{tpu_custom_call.1} parent=0
    #allocation2 [shape = 'u8[4096]{0}', space=vmem, size = 0x1000, scoped, tag = 'input window, operand 0, single buffered']
    #allocation3 [shape = 's32[1]{0}', space=sflag, size = 0x4, scoped, tag = 'scoped memory for tpu_custom_call.1']
    #allocation4 [shape = 's32[1]{0}', space=sflag, size = 0x4, scoped, tag = 'scoped memory for tpu_custom_call.1']
    #allocation5 [shape = 'u8[16384]{0}', space=vmem, size = 0x4000, scoped, tag = 'input window, operand 1, single buffered']
    #allocation6 [shape = 's32[1]{0}', space=sflag, size = 0x4, scoped, tag = 'scoped memory for tpu_custom_call.1']
    #allocation7 [shape = 'u8[32768]{0}', space=vmem, size = 0x8000, scoped, tag = 'input window, operand 2, single buffered']
    #allocation8 [shape = 'u8[32768]{0}', space=vmem, size = 0x8000, scoped, tag = 'input window, operand 3, single buffered']
    #allocation9 [shape = 's32[1]{0}', space=sflag, size = 0x4, scoped, tag = 'scoped memory for tpu_custom_call.1']
    #allocation10 [shape = 'u8[32768]{0}', space=vmem, size = 0x8000, scoped, tag = 'input window, operand 4, single buffered']
    #allocation11 [shape = 'u8[4096]{0}', space=vmem, size = 0x1000, scoped, tag = 'output window, operand 0, single buffered']
    %11 = vsyncpa [#allocation3], 0
    %12 = vsyncpa [#allocation6], 0
    %13 = vsyncpa [#allocation9], 0
    %14 = vsyncpa [#allocation4], 0
    // Predicated region
    $region2: #{tpu_custom_call.1} parent=1 // pred_check
      _
    $region3: #{tpu_custom_call.1} parent=1 // pred_check_branch
      %16 = sbr.rel (0) target = $region5
    $region4: #{tpu_custom_call.1} parent=1 // pred_region
      %18 = vsyncadd [#allocation3], 0
      %s20 = sshll.u32 %s0, 4
      %s21 = int_to_ptr.hbm [resolvable:$true] %s20
      %s22 = sshll.u32 [#allocation2], 4
      %s23 = int_to_ptr.vmem [resolvable:$true] %s22
      %25 = dma.hbm_to_vmem [thread:$0]  %s21, 128, %s23, [#allocation3]
    $region5: #{tpu_custom_call.1} parent=1 // pred_fallthru
      _
    // Predicated region
    $region6: #{tpu_custom_call.1} parent=1 // pred_check
      _
    $region7: #{tpu_custom_call.1} parent=1 // pred_check_branch
      %27 = sbr.rel (0) target = $region9
    $region8: #{tpu_custom_call.1} parent=1 // pred_region
      %29 = vsyncadd [#allocation6], 0
      %s30 = sshll.u32 %s1, 4
      %s31 = int_to_ptr.hbm [resolvable:$true] %s30
      %s32 = sshll.u32 [#allocation5], 4
      %s33 = int_to_ptr.vmem [resolvable:$true] %s32
      %38 = dma.hbm_to_vmem [thread:$0]  %s31, 512, %s33, [#allocation6], 128, 128, 8
    $region9: #{tpu_custom_call.1} parent=1 // pred_fallthru
      _
    // Predicated region
    $region10: #{tpu_custom_call.1} parent=1 // pred_check
      _
    $region11: #{tpu_custom_call.1} parent=1 // pred_check_branch
      %40 = sbr.rel (0) target = $region13
    $region12: #{tpu_custom_call.1} parent=1 // pred_region
      %42 = vsyncadd [#allocation6], 0
      %s43 = sshll.u32 %s2, 4
      %s44 = int_to_ptr.hbm [resolvable:$true] %s43
      %s45 = sshll.u32 [#allocation7], 4
      %s46 = int_to_ptr.vmem [resolvable:$true] %s45
      %51 = dma.hbm_to_vmem [thread:$0]  %s44, 1024, %s46, [#allocation6], 128, 128, 8
    $region13: #{tpu_custom_call.1} parent=1 // pred_fallthru
      _
    // Predicated region
    $region14: #{tpu_custom_call.1} parent=1 // pred_check
      _
    $region15: #{tpu_custom_call.1} parent=1 // pred_check_branch
      %53 = sbr.rel (0) target = $region17
    $region16: #{tpu_custom_call.1} parent=1 // pred_region
      %55 = vsyncadd [#allocation9], 0
      %s56 = sshll.u32 %s3, 4
      %s57 = int_to_ptr.hbm [resolvable:$true] %s56
      %s58 = sshll.u32 [#allocation8], 4
      %s59 = int_to_ptr.vmem [resolvable:$true] %s58
      %64 = dma.hbm_to_vmem [thread:$0]  %s57, 1024, %s59, [#allocation9], 128, 128, 8
    $region17: #{tpu_custom_call.1} parent=1 // pred_fallthru
      _
    // Predicated region
    $region18: #{tpu_custom_call.1} parent=1 // pred_check
      _
    $region19: #{tpu_custom_call.1} parent=1 // pred_check_branch
      %66 = sbr.rel (0) target = $region21
    $region20: #{tpu_custom_call.1} parent=1 // pred_region
      %68 = vsyncadd [#allocation9], 0
      %s69 = sshll.u32 %s4, 4
      %s70 = int_to_ptr.hbm [resolvable:$true] %s69
      %s71 = sshll.u32 [#allocation10], 4
      %s72 = int_to_ptr.vmem [resolvable:$true] %s71
      %77 = dma.hbm_to_vmem [thread:$0]  %s70, 1024, %s72, [#allocation9], 128, 128, 8
    $region21: #{tpu_custom_call.1} parent=1 // pred_fallthru
      _
    // Predicated region
    $region22: #{tpu_custom_call.1} parent=1 // pred_check
      _
    $region23: #{tpu_custom_call.1} parent=1 // pred_check_branch
      %79 = sbr.rel (0) target = $region25
    $region24: #{tpu_custom_call.1} parent=1 // pred_region
      _
    $region25: #{tpu_custom_call.1} parent=1 // pred_fallthru
      _
    // Predicated region
    $region26: #{tpu_custom_call.1} parent=1 // pred_check
      _
    $region27: #{tpu_custom_call.1} parent=1 // pred_check_branch
      %81 = sbr.rel (0) target = $region29
    $region28: #{tpu_custom_call.1} parent=1 // pred_region
      %83 = dma.done [#allocation3], 128
    $region29: #{tpu_custom_call.1} parent=1 // pred_fallthru
      _
    // Predicated region
    $region30: #{tpu_custom_call.1} parent=1 // pred_check
      _
    $region31: #{tpu_custom_call.1} parent=1 // pred_check_branch
      %85 = sbr.rel (0) target = $region33
    $region32: #{tpu_custom_call.1} parent=1 // pred_region
      %87 = dma.done [#allocation6], 512
    $region33: #{tpu_custom_call.1} parent=1 // pred_fallthru
      _
    // Predicated region
    $region34: #{tpu_custom_call.1} parent=1 // pred_check
      _
    $region35: #{tpu_custom_call.1} parent=1 // pred_check_branch
      %89 = sbr.rel (0) target = $region37
    $region36: #{tpu_custom_call.1} parent=1 // pred_region
      %91 = dma.done [#allocation6], 1024
    $region37: #{tpu_custom_call.1} parent=1 // pred_fallthru
      _
    // Predicated region
    $region38: #{tpu_custom_call.1} parent=1 // pred_check
      _
    $region39: #{tpu_custom_call.1} parent=1 // pred_check_branch
      %93 = sbr.rel (0) target = $region41
    $region40: #{tpu_custom_call.1} parent=1 // pred_region
      %95 = dma.done [#allocation9], 1024
    $region41: #{tpu_custom_call.1} parent=1 // pred_fallthru
      _
    // Predicated region
    $region42: #{tpu_custom_call.1} parent=1 // pred_check
      _
    $region43: #{tpu_custom_call.1} parent=1 // pred_check_branch
      %97 = sbr.rel (0) target = $region45
    $region44: #{tpu_custom_call.1} parent=1 // pred_region
      %99 = dma.done [#allocation9], 1024
    $region45: #{tpu_custom_call.1} parent=1 // pred_fallthru
      _
    %v100 = vld [vmem:[#allocation2] sm:$0xff]
    %v101 = vld [vmem:[#allocation5] sm:$0xff]
    %v102 = vld [vmem:[#allocation5 + $0x8] sm:$0xff]
    %v103 = vld [vmem:[#allocation5 + $0x10] sm:$0xff]
    %v104 = vld [vmem:[#allocation5 + $0x18] sm:$0x1]
    %v105 = vld [vmem:[%s5] sm:$0x1]
    %v106 = vperm.slane %v105, 0
    %vm107 = vcmask 203776
    %v109 = vsel %vm107, %v100, 0
    %vm111 = vcmask 1040384
    %v113 = vsel %vm111, %v104, 0
    %115 = vmatpush.msra.mxu0 0.0
    %116 = vmatpush.msra.mxu0 0.0
    %117 = vmatpush.msra.mxu0 0.0
    %118 = vmatpush.msra.mxu0 0.0
    %119 = vmatpush.msra.mxu0 0.0
    %120 = vmatpush.msra.mxu0 0.0
    %121 = vmatpush.msra.mxu0 0.0
    %122 = vmatpush.msra.mxu0 0.0
    %123 = vmatpush.msra.mxu0 0.0
    %124 = vmatpush.msra.mxu0 0.0
    %125 = vmatpush.msra.mxu0 0.0
    %126 = vmatpush.msra.mxu0 0.0
    %127 = vmatpush.msra.mxu0 %v113
    %128 = vmatpush.msra.mxu0 %v103
    %129 = vmatpush.msra.mxu0 %v102
    %130 = vmatpush.msra.mxu0 %v101
    %131 = vmatmul.f32.gmra.mxu0 %v109
    %v132 = vpop.f32.mrf.mxu0
    %v133 = vadd.f32 %v106, %v132
    %134 = vdwg.mxu0
    %v135 = vmax.f32 %v133, 0.0
    %v136 = vld [vmem:[#allocation7] sm:$0xff]
    %v137 = vld [vmem:[#allocation7 + $0x8] sm:$0xff]
    %v138 = vld [vmem:[#allocation7 + $0x10] sm:$0xff]
    %v139 = vld [vmem:[#allocation7 + $0x18] sm:$0xff]
    %v140 = vld [vmem:[#allocation7 + $0x20] sm:$0xff]
    %v141 = vld [vmem:[#allocation7 + $0x28] sm:$0xff]
    %v142 = vld [vmem:[#allocation7 + $0x30] sm:$0xff]
    %v143 = vld [vmem:[#allocation7 + $0x38] sm:$0xff]
    %v144 = vld [vmem:[%s5 + $0x1] sm:$0x1]
    %v145 = vperm.slane %v144, 0
    %vm146 = vcmask 523264
    %v148 = vsel %vm146, %v135, 0
    %150 = vmatpush.msra.mxu0 0.0
    %151 = vmatpush.msra.mxu0 0.0
    %152 = vmatpush.msra.mxu0 0.0
    %153 = vmatpush.msra.mxu0 0.0
    %154 = vmatpush.msra.mxu0 0.0
    %155 = vmatpush.msra.mxu0 0.0
    %156 = vmatpush.msra.mxu0 0.0
    %157 = vmatpush.msra.mxu0 0.0
    %158 = vmatpush.msra.mxu0 %v143
    %159 = vmatpush.msra.mxu0 %v142
    %160 = vmatpush.msra.mxu0 %v141
    %161 = vmatpush.msra.mxu0 %v140
    %162 = vmatpush.msra.mxu0 %v139
    %163 = vmatpush.msra.mxu0 %v138
    %164 = vmatpush.msra.mxu0 %v137
    %165 = vmatpush.msra.mxu0 %v136
    %166 = vmatmul.f32.gmra.mxu0 %v148
    %v167 = vpop.f32.mrf.mxu0
    %v168 = vadd.f32 %v145, %v167
    %169 = vdwg.mxu0
    %v170 = vmax.f32 %v168, 0.0
    %v171 = vld [vmem:[#allocation8] sm:$0xff]
    %v172 = vld [vmem:[#allocation8 + $0x8] sm:$0xff]
    %v173 = vld [vmem:[#allocation8 + $0x10] sm:$0xff]
    %v174 = vld [vmem:[#allocation8 + $0x18] sm:$0xff]
    %v175 = vld [vmem:[#allocation8 + $0x20] sm:$0xff]
    %v176 = vld [vmem:[#allocation8 + $0x28] sm:$0xff]
    %v177 = vld [vmem:[#allocation8 + $0x30] sm:$0xff]
    %v178 = vld [vmem:[#allocation8 + $0x38] sm:$0xff]
    %v179 = vld [vmem:[%s5 + $0x2] sm:$0x1]
    %v180 = vperm.slane %v179, 0
    %v182 = vsel %vm146, %v170, 0
    %184 = vmatpush.msra.mxu0 0.0
    %185 = vmatpush.msra.mxu0 0.0
    %186 = vmatpush.msra.mxu0 0.0
    %187 = vmatpush.msra.mxu0 0.0
    %188 = vmatpush.msra.mxu0 0.0
    %189 = vmatpush.msra.mxu0 0.0
    %190 = vmatpush.msra.mxu0 0.0
    %191 = vmatpush.msra.mxu0 0.0
    %192 = vmatpush.msra.mxu0 %v178
    %193 = vmatpush.msra.mxu0 %v177
    %194 = vmatpush.msra.mxu0 %v176
    %195 = vmatpush.msra.mxu0 %v175
    %196 = vmatpush.msra.mxu0 %v174
    %197 = vmatpush.msra.mxu0 %v173
    %198 = vmatpush.msra.mxu0 %v172
    %199 = vmatpush.msra.mxu0 %v171
    %200 = vmatmul.f32.gmra.mxu0 %v182
    %v201 = vpop.f32.mrf.mxu0
    %v202 = vadd.f32 %v180, %v201
    %203 = vdwg.mxu0
    %v204 = vmax.f32 %v202, 0.0
    %v205 = vld [vmem:[#allocation10] sm:$0xff]
    %v206 = vld [vmem:[#allocation10 + $0x8] sm:$0xff]
    %v207 = vld [vmem:[#allocation10 + $0x10] sm:$0xff]
    %v208 = vld [vmem:[#allocation10 + $0x18] sm:$0xff]
    %v209 = vld [vmem:[#allocation10 + $0x20] sm:$0xff]
    %v210 = vld [vmem:[#allocation10 + $0x28] sm:$0xff]
    %v211 = vld [vmem:[#allocation10 + $0x30] sm:$0xff]
    %v212 = vld [vmem:[#allocation10 + $0x38] sm:$0xff]
    %v213 = vld [vmem:[%s5 + $0x3] sm:$0x1]
    %v214 = vperm.slane %v213, 0
    %v216 = vsel %vm146, %v204, 0
    %218 = vmatpush.msra.mxu0 0.0
    %219 = vmatpush.msra.mxu0 0.0
    %220 = vmatpush.msra.mxu0 0.0
    %221 = vmatpush.msra.mxu0 0.0
    %222 = vmatpush.msra.mxu0 0.0
    %223 = vmatpush.msra.mxu0 0.0
    %224 = vmatpush.msra.mxu0 0.0
    %225 = vmatpush.msra.mxu0 0.0
    %226 = vmatpush.msra.mxu0 %v212
    %227 = vmatpush.msra.mxu0 %v211
    %228 = vmatpush.msra.mxu0 %v210
    %229 = vmatpush.msra.mxu0 %v209
    %230 = vmatpush.msra.mxu0 %v208
    %231 = vmatpush.msra.mxu0 %v207
    %232 = vmatpush.msra.mxu0 %v206
    %233 = vmatpush.msra.mxu0 %v205
    %234 = vmatmul.f32.gmra.mxu0 %v216
    %v235 = vpop.f32.mrf.mxu0
    %v236 = vadd.f32 %v214, %v235
    %237 = vdwg.mxu0
    %238 = vst [vmem:[#allocation11] sm:$0xff] %v236
    // Predicated region
    $region46: #{tpu_custom_call.1} parent=1 // pred_check
      _
    $region47: #{tpu_custom_call.1} parent=1 // pred_check_branch
      %240 = sbr.rel (0) target = $region49
    $region48: #{tpu_custom_call.1} parent=1 // pred_region
      %242 = vsyncadd [#allocation4], 0
      %s244 = sshll.u32 [#allocation11], 4
      %s245 = int_to_ptr.vmem [resolvable:$true] %s244
      %s246 = sshll.u32 %s6, 4
      %s247 = int_to_ptr.hbm [resolvable:$true] %s246
      %249 = dma.vmem_to_hbm [thread:$0]  %s245, 128, %s247, [#allocation4]
    $region49: #{tpu_custom_call.1} parent=1 // pred_fallthru
      _
    // Predicated region
    $region50: #{tpu_custom_call.1} parent=1 // pred_check
      _
    $region51: #{tpu_custom_call.1} parent=1 // pred_check_branch
      %251 = sbr.rel (0) target = $region53
    $region52: #{tpu_custom_call.1} parent=1 // pred_region
      %253 = dma.done [#allocation4], 128
    $region53: #{tpu_custom_call.1} parent=1 // pred_fallthru
      _
    %254 = vsyncpa [#allocation3], 1
    %255 = vsyncpa [#allocation6], 1
    %256 = vsyncpa [#allocation9], 1
    %257 = vsyncpa [#allocation4], 1

</llo_original>
